<compile_context>
chip_gen: v5e
topology: v5e:2x2
jax: 0.10.0
libtpu: 0.0.40
codegen_flags: <defaults>
</compile_context>

<pallas_src>
import functools
import math

import jax
import jax.numpy as jnp
from jax.experimental import pallas as pl
from jax.experimental.pallas import tpu as pltpu


def _am_softmax_kernel(pred_ref, tgt_ref, sum_all_ref, sum_tgt_ref, *,
                       scale, epsilon, c_actual, block_c, needs_mask,
                       bf16_exp):
    j = pl.program_id(0)
    x = pred_ref[...].astype(jnp.float32)          # (N, TC), cast in-kernel
    tgt = tgt_ref[...]                             # (N, 1) int32
    n, tc = x.shape

    # Column-wise (dim=0) L2 norm — local to this class tile.
    col_sq = jnp.sum(x * x, axis=0, keepdims=True)               # (1, TC)
    inv = scale / (jnp.sqrt(col_sq) + epsilon)     # softmax scale fused in
    z = x * inv                                    # s * x / (||col|| + eps)
    if bf16_exp:
        # v6e/v7x EUP runs bf16 ~2x the f32 rate; keep f32 on v5e.
        exp_z = jnp.exp(z.astype(jnp.bfloat16)).astype(jnp.float32)
    else:
        exp_z = jnp.exp(z)

    # (1, TC) global class indices; broadcast against the (N, 1) target.
    col = jax.lax.broadcasted_iota(jnp.int32, (1, tc), 1) + j * block_c

    # Per-row sums over the class axis (XLU reduce; exp on the EUP dominates).
    sum_all_ref[0] = jnp.sum(exp_z, axis=-1, keepdims=True)
    # target < C always, so OOB/padded lanes can never be selected here.
    sum_tgt_ref[0] = jnp.sum(jnp.where(col == tgt, exp_z, 0.0),
                             axis=-1, keepdims=True)

    if needs_mask:
        # Only the last tile can contain lanes >= C (unspecified data from the
        # partial block); redo its all-classes sum with those lanes zeroed.
        @pl.when(j == pl.num_programs(0) - 1)
        def _():
            masked = jnp.where(col < c_actual, exp_z, 0.0)
            sum_all_ref[0] = jnp.sum(masked, axis=-1, keepdims=True)


def additive_margin_softmax(predicted, target, margin=0.35, s=30.0,
                            epsilon=1e-12, block_c=None, bf16_exp=False):
    """predicted: (N, C) float (any dtype); target: (N,) int. Scalar f32 loss."""
    n, c = predicted.shape
    tgt2d = target.astype(jnp.int32).reshape(n, 1)
    itemsize = jnp.dtype(predicted.dtype).itemsize

    # Per-chip physical VMEM (v5e/v6e: 128 MiB, v7x: 64 MiB); conservative
    # fallback if the query is unavailable.
    try:
        vmem_phys = int(pltpu.get_tpu_info().vmem_capacity_bytes)
    except Exception:
        vmem_phys = 64 * 2**20

    # Class-tile width from a VMEM budget: double-buffered input tile plus
    # ~3 f32 (N, TC) temporaries, kept under ~1/3 of physical VMEM.
    if block_c is None:
        budget = vmem_phys // 3
        per_lane = n * (2 * itemsize + 3 * 4)
        block_c = max(128, min(2048, (budget // per_lane) // 128 * 128))
    if c <= block_c:
        tc = c                       # single full-width block, no masking
        needs_mask = False
    else:
        tc = block_c                 # multiple of 128; partial last block masked
        needs_mask = (c % tc) != 0
    grid_c = pl.cdiv(c, tc)

    kernel = functools.partial(
        _am_softmax_kernel, scale=float(s), epsilon=float(epsilon),
        c_actual=c, block_c=tc, needs_mask=needs_mask, bf16_exp=bool(bf16_exp))

    cost = pl.CostEstimate(
        flops=6 * n * c,
        transcendentals=n * c + c,
        bytes_accessed=n * c * itemsize + n * 4 + 2 * grid_c * n * 4,
    )

    params = dict(dimension_semantics=("parallel",))
    # Raise the scoped-VMEM limit when the tile footprint needs it.  Trigger
    # is below v5e's 16 MiB default; cap stays below physical VMEM (v7x safe).
    vmem_need = 2 * n * tc * itemsize + 3 * n * tc * 4 + (1 << 20)
    if vmem_need > 12 * 2**20:
        params["vmem_limit_bytes"] = int(min(vmem_need + 4 * 2**20,
                                             vmem_phys - 8 * 2**20))

    part_all, part_tgt = pl.pallas_call(
        kernel,
        out_shape=(jax.ShapeDtypeStruct((grid_c, n, 1), jnp.float32),
                   jax.ShapeDtypeStruct((grid_c, n, 1), jnp.float32)),
        grid_spec=pltpu.PrefetchScalarGridSpec(
            num_scalar_prefetch=0,
            grid=(grid_c,),
            in_specs=[
                pl.BlockSpec((n, tc), lambda j: (0, j)),   # dtype passes through
                pl.BlockSpec((n, 1), lambda j: (0, 0)),
            ],
            out_specs=[
                pl.BlockSpec((1, n, 1), lambda j: (j, 0, 0)),
                pl.BlockSpec((1, n, 1), lambda j: (j, 0, 0)),
            ],
        ),
        compiler_params=pltpu.CompilerParams(**params),
        cost_estimate=cost,
    )(predicted, tgt2d)

    # Tiny epilogue on the (grid_c, N) partials — negligible vs N*C exps.
    sum_all = jnp.sum(part_all[:, :, 0], axis=0)            # sum_j exp(s*x_hat)
    exp_sy = jnp.sum(part_tgt[:, :, 0], axis=0)             # exp(s * cos_y)
    exp_s = exp_sy * math.exp(-float(s) * float(margin))    # exp(s*(cos_y - m))
    sum_j = sum_all - exp_sy
    return jnp.mean(-jnp.log(exp_s / (exp_s + sum_j + epsilon)))


def _reference(predicted, target, margin=0.35, s=30.0, epsilon=1e-12):
    # Pure-JAX reference mirroring the PyTorch code, for a sanity check.
    p = predicted.astype(jnp.float32)
    p = p / (jnp.linalg.norm(p, axis=0) + epsilon)
    cos_y = p[jnp.arange(p.shape[0]), target]
    exp_s = jnp.exp(s * (cos_y - margin))
    sum_j = jnp.sum(jnp.exp(s * p), axis=1) - jnp.exp(s * cos_y)
    return jnp.mean(-jnp.log(exp_s / (exp_s + sum_j + epsilon)))


if __name__ == "__main__":
    key = jax.random.PRNGKey(0)
    k1, k2 = jax.random.split(key)

    N, C = 8, 32  # small shapes: batch=8, num_classes=32
    predicted = jax.random.normal(k1, (N, C), dtype=jnp.float32)
    target = jax.random.randint(k2, (N,), 0, C, dtype=jnp.int32)

    loss = additive_margin_softmax(predicted, target)
    jax.block_until_ready(loss)

    ref = _reference(predicted, target)
    assert jnp.allclose(loss, ref, rtol=1e-4, atol=1e-5), (loss, ref)

    print("KERNEL_OK")
</pallas_src>

<mosaic_0001>
module attributes {stable_mosaic.version = 11 : i64} {
  func.func @_am_softmax_kernel(%arg0: i32, %arg1: memref<8x32xf32, #tpu.memory_space<vmem>>, %arg2: memref<8x1xi32, #tpu.memory_space<vmem>>, %arg3: memref<1x8x1xf32, #tpu.memory_space<vmem>>, %arg4: memref<1x8x1xf32, #tpu.memory_space<vmem>>) attributes {dimension_semantics = [#tpu.dimension_semantics<parallel>], iteration_bounds = array<i64: 1>, scalar_prefetch = 0 : i64, scratch_operands = 0 : i64, tpu.core_type = #tpu.core_type<tc>, window_params = [{transform_indices = @transform_0, window_bounds = array<i64: 8, 32>}, {pipeline_mode = #tpu.pipeline_mode<synchronous>, transform_indices = @transform_1, window_bounds = array<i64: 8, 1>}, {transform_indices = @transform_2, window_bounds = array<i64: 1, 8, 1>}, {transform_indices = @transform_3, window_bounds = array<i64: 1, 8, 1>}]} {
    %c0 = arith.constant 0 : index
    %c0_0 = arith.constant 0 : index
    %0 = vector.load %arg1[%c0, %c0_0] : memref<8x32xf32, #tpu.memory_space<vmem>>, vector<8x32xf32>
    %c0_1 = arith.constant 0 : index
    %c0_2 = arith.constant 0 : index
    %1 = vector.load %arg2[%c0_1, %c0_2] : memref<8x1xi32, #tpu.memory_space<vmem>>, vector<8x1xi32>
    %2 = arith.mulf %0, %0 : vector<8x32xf32>
    %cst = arith.constant dense<0.000000e+00> : vector<32xf32>
    %3 = vector.multi_reduction <add>, %2, %cst [0] : vector<8x32xf32> to vector<32xf32>
    %4 = vector.shape_cast %3 : vector<32xf32> to vector<1x32xf32>
    %5 = math.sqrt %4 : vector<1x32xf32>
    %cst_3 = arith.constant 9.99999996E-13 : f32
    %6 = vector.broadcast %cst_3 : f32 to vector<1x32xf32>
    %7 = arith.addf %5, %6 : vector<1x32xf32>
    %cst_4 = arith.constant 3.000000e+01 : f32
    %8 = vector.broadcast %cst_4 : f32 to vector<1x32xf32>
    %9 = arith.divf %8, %7 : vector<1x32xf32>
    %10 = vector.broadcast %9 : vector<1x32xf32> to vector<8x32xf32>
    %11 = arith.mulf %0, %10 : vector<8x32xf32>
    %12 = math.exp %11 : vector<8x32xf32>
    %13 = tpu.iota {dimensions = array<i32: 1>} : vector<1x32xi32>
    %c32_i32 = arith.constant 32 : i32
    %14 = arith.muli %arg0, %c32_i32 : i32
    %15 = vector.broadcast %14 : i32 to vector<1x32xi32>
    %16 = arith.addi %13, %15 : vector<1x32xi32>
    %cst_5 = arith.constant dense<0.000000e+00> : vector<8xf32>
    %17 = vector.multi_reduction <add>, %12, %cst_5 [1] : vector<8x32xf32> to vector<8xf32>
    %18 = vector.shape_cast %17 : vector<8xf32> to vector<8x1xf32>
    %c0_6 = arith.constant 0 : index
    %c0_7 = arith.constant 0 : index
    %c0_8 = arith.constant 0 : index
    %19 = vector.load %arg3[%c0_6, %c0_7, %c0_8] : memref<1x8x1xf32, #tpu.memory_space<vmem>>, vector<1x8x1xf32>
    %20 = vector.shape_cast %19 : vector<1x8x1xf32> to vector<8x1xf32>
    %21 = vector.shape_cast %18 : vector<8x1xf32> to vector<1x8x1xf32>
    tpu.vector_store %arg3[%c0_6, %c0_7, %c0_8], %21 {strides = array<i32>} : memref<1x8x1xf32, #tpu.memory_space<vmem>>, vector<1x8x1xf32>,
    %22 = vector.broadcast %16 : vector<1x32xi32> to vector<8x32xi32>
    %23 = vector.broadcast %1 : vector<8x1xi32> to vector<8x32xi32>
    %24 = arith.cmpi eq, %22, %23 : vector<8x32xi32>
    %cst_9 = arith.constant 0.000000e+00 : f32
    %25 = vector.broadcast %cst_9 : f32 to vector<8x32xf32>
    %26 = arith.select %24, %12, %25 : vector<8x32xi1>, vector<8x32xf32>
    %cst_10 = arith.constant dense<0.000000e+00> : vector<8xf32>
    %27 = vector.multi_reduction <add>, %26, %cst_10 [1] : vector<8x32xf32> to vector<8xf32>
    %28 = vector.shape_cast %27 : vector<8xf32> to vector<8x1xf32>
    %c0_11 = arith.constant 0 : index
    %c0_12 = arith.constant 0 : index
    %c0_13 = arith.constant 0 : index
    %29 = vector.load %arg4[%c0_11, %c0_12, %c0_13] : memref<1x8x1xf32, #tpu.memory_space<vmem>>, vector<1x8x1xf32>
    %30 = vector.shape_cast %29 : vector<1x8x1xf32> to vector<8x1xf32>
    %31 = vector.shape_cast %28 : vector<8x1xf32> to vector<1x8x1xf32>
    tpu.vector_store %arg4[%c0_11, %c0_12, %c0_13], %31 {strides = array<i32>} : memref<1x8x1xf32, #tpu.memory_space<vmem>>, vector<1x8x1xf32>,
    return
  }
  func.func @transform_0(%arg0: i32) -> (i32, i32) {
    %c0_i32 = arith.constant 0 : i32
    %c0_i32_0 = arith.constant 0 : i32
    return %c0_i32, %arg0 : i32, i32
  }
  func.func @transform_1(%arg0: i32) -> (i32, i32) {
    %c0_i32 = arith.constant 0 : i32
    %c0_i32_0 = arith.constant 0 : i32
    %c0_i32_1 = arith.constant 0 : i32
    return %c0_i32, %c0_i32_0 : i32, i32
  }
  func.func @transform_2(%arg0: i32) -> (i32, i32, i32) {
    %c0_i32 = arith.constant 0 : i32
    %c0_i32_0 = arith.constant 0 : i32
    %c0_i32_1 = arith.constant 0 : i32
    return %arg0, %c0_i32, %c0_i32_0 : i32, i32, i32
  }
  func.func @transform_3(%arg0: i32) -> (i32, i32, i32) {
    %c0_i32 = arith.constant 0 : i32
    %c0_i32_0 = arith.constant 0 : i32
    %c0_i32_1 = arith.constant 0 : i32
    return %arg0, %c0_i32, %c0_i32_0 : i32, i32, i32
  }
}

</mosaic_0001>

<llo_original>
// kernel: tpu_custom_call.1
$region0: #{tpu_custom_call.1}
  #allocation0 [shape = 'u32[]', space=smem, size = 0x4, offset = 0x4, fixed_abs, tag = 'smem constant byte address 0x4 - core index']
  #allocation1 [shape = 'u32[72,128]{1,0:T(1,128)}', space=vmem, size = 0x9000, scoped, tag = 'internal scratch']
  %s0 = inlined_call_operand.vmem [shape: f32[8,32], index: 0, kind: input, shape index: {}]
  %s1 = inlined_call_operand.vmem [shape: s32[8,1], index: 1, kind: input, shape index: {}]
  %s2 = inlined_call_operand.vmem [shape: f32[1,8,1], index: 2, kind: output, shape index: {0}]
  %s3 = inlined_call_operand.vmem [shape: f32[1,8,1], index: 3, kind: output, shape index: {1}]
  %4 = xla_tuple %s2, %s3
  %s5 = sld [smem:[#allocation0]]
  $region26: #{tpu_custom_call.1} parent=0
    _
  %s7 = ssub.s32 1, %s5
  %s8 = scalar_select 0, %s7, %s5
  // Predicated region
  $region2: #{tpu_custom_call.1} parent=0 // pred_check
    _
  $region3: #{tpu_custom_call.1} parent=0 // pred_check_branch
    %10 = sbr.rel (0) target = $region5
  $region4: #{tpu_custom_call.1} parent=0 // pred_region
    _
  $region5: #{tpu_custom_call.1} parent=0 // pred_fallthru
    _
  // Predicated region
  $region6: #{tpu_custom_call.1} parent=0 // pred_check
    _
  $region7: #{tpu_custom_call.1} parent=0 // pred_check_branch
    %12 = sbr.rel (0) target = $region9
  $region8: #{tpu_custom_call.1} parent=0 // pred_region
    _
  $region9: #{tpu_custom_call.1} parent=0 // pred_fallthru
    _
  %v13 = vld [vmem:[%s0] sm:$0xff]
  %v14 = vld [vmem:[%s1] sm:$0xff]
  %v15 = vmul.f32 %v13, %v13
  %vm16 = vcmask 261120
  %v17 = vsel %vm16, %v15, 0.0
  %v18 = vrot.slane %v17, 4
  %v19 = vadd.f32 %v17, %v18
  %v20 = vrot.slane %v19, 2
  %v21 = vadd.f32 %v19, %v20
  %v22 = vrot.slane %v21, 1
  %v23 = vadd.f32 %v21, %v22
  %v24 = vrsqrt.pop %v23
  %v25 = vmul.f32 %v24, %v23
  %v26 = vmul.f32 %v25, %v24
  %v27 = vmul.f32 0.5, %v26
  %v28 = vsub.f32 1.5, %v27
  %v29 = vmul.f32 %v24, %v28
  %v30 = vmul.f32 %v23, %v29
  %vm31 = vcmp.eq.f32.partialorder %v23, inf
  %v32 = vsel %vm31, %v23, %v30
  %vm33 = vcmp.eq.f32.partialorder %v23, 0.0
  %v34 = vand.u32 %v23, 2147483648
  %v35 = vsel %vm33, %v34, %v32
  %v36 = vadd.f32 %v35, 1e-12
  %v37 = vrcp.pop %v36
  %v38 = vmul.f32 %v36, %v37
  %v39 = vsub.f32 1.0, %v38
  %v40 = vmul.f32 %v37, %v39
  %v41 = vadd.f32 %v37, %v40
  %vm42 = vweird.f32 %v36
  %vm43 = vweird.f32 %v37
  %vm44 = vmor %vm42, %vm43
  %v45 = vsel %vm44, %v37, %v41
  %v46 = vand.u32 2147483647, %v36
  %vm47 = vcmp.eq.f32.partialorder %v46, 8.507059e+37
  %v48 = vand.u32 %v36, 2147483648
  %v49 = vor.u32 1.1754944e-38, %v48
  %v50 = vsel %vm47, %v49, %v45
  %v51 = vmul.f32 30.0, %v50
  %v52 = vmul.f32 %v13, %v51
  %v53 = vmul.f32 %v52, 1.442695
  %v54 = vpow.pop %v53
  %v55 = vlaneseq
  %v56 = vand.u32 %v55, 127
  %s57 = smul.u32 0, 32
  %v58 = vstv %s57
  %v59 = vadd.s32 %v56, %v58
  %v60 = vsel %vm16, %v54, 0.0
  %61 = vadd.xlane.f32.xlu0 %v60
  %v62 = vpop.xlane.xlu0 %61
  %vm63 = vcmask 7168
  %64 = vst.msk [vmem:[%s2] sm:$0xff] %vm63, %v62
  %65 = vset.pattern.permute.xlu0 0
  %66 = vperm.xlu0 %65, %v14
  %v67 = vpop.permute.xlu0 %66
  %vm68 = vcmp.eq.s32.totalorder %v59, %v67
  %v69 = vsel %vm68, %v54, 0.0
  %v70 = vsel %vm16, %v69, 0.0
  %71 = vadd.xlane.f32.xlu0 %v70
  %v72 = vpop.xlane.xlu0 %71
  %73 = vst.msk [vmem:[%s3] sm:$0xff] %vm63, %v72
  // Predicated region
  $region10: #{tpu_custom_call.1} parent=0 // pred_check
    _
  $region11: #{tpu_custom_call.1} parent=0 // pred_check_branch
    %75 = sbr.rel (0) target = $region13
  $region12: #{tpu_custom_call.1} parent=0 // pred_region
    _
  $region13: #{tpu_custom_call.1} parent=0 // pred_fallthru
    _
  // Predicated region
  $region14: #{tpu_custom_call.1} parent=0 // pred_check
    _
  $region15: #{tpu_custom_call.1} parent=0 // pred_check_branch
    %77 = sbr.rel (0) target = $region17
  $region16: #{tpu_custom_call.1} parent=0 // pred_region
    _
  $region17: #{tpu_custom_call.1} parent=0 // pred_fallthru
    _
  // Predicated region
  $region18: #{tpu_custom_call.1} parent=0 // pred_check
    _
  $region19: #{tpu_custom_call.1} parent=0 // pred_check_branch
    %79 = sbr.rel (0) target = $region21
  $region20: #{tpu_custom_call.1} parent=0 // pred_region
    _
  $region21: #{tpu_custom_call.1} parent=0 // pred_fallthru
    _
  // Predicated region
  $region22: #{tpu_custom_call.1} parent=0 // pred_check
    _
  $region23: #{tpu_custom_call.1} parent=0 // pred_check_branch
    %81 = sbr.rel (0) target = $region25
  $region24: #{tpu_custom_call.1} parent=0 // pred_region
    _
  $region25: #{tpu_custom_call.1} parent=0 // pred_fallthru
    _

</llo_original>
